<compile_context>
chip_gen: v5e
topology: v5e:2x2
jax: 0.10.0
libtpu: 0.0.40
codegen_flags: <defaults>
</compile_context>

<pallas_src>
import functools

import jax
import jax.numpy as jnp
from jax.experimental import pallas as pl
from jax.experimental.pallas import tpu as pltpu

F_IN = 151    # logical feature width of the PyTorch module
F_PAD = 256   # lane-dense feature width used for weights / matmuls


def _cdiv(a, b):
    return -(-a // b)


def _round_up(n, m):
    return ((n + m - 1) // m) * m


def _network_selector_kernel(x_ref, w_ref, b_ref, o_ref, xs_ref):
    """One batch tile of the 3-layer residual MLP.

    x_ref : (tb, 151) input tile (streamed straight from HBM, any float dtype)
    w_ref : (3, 256, 256) bf16  zero-padded (in, out) weights, VMEM-resident
    b_ref : (3, 1, 256)  f32    zero-padded biases
    o_ref : (tb, 151) output tile
    xs_ref: (tb, 256) bf16 VMEM staging slab for the lane-padded input
    """
    tb = xs_ref.shape[0]

    # Stage x into a lane-dense 256-wide bf16 slab; pad lanes must be zero so
    # the zero-padded weight rows contribute exactly nothing.
    xs_ref[:, F_IN:] = jnp.zeros((tb, F_PAD - F_IN), xs_ref.dtype)
    xs_ref[:, :F_IN] = x_ref[...].astype(jnp.bfloat16)
    xp = xs_ref[...]                                   # (tb, 256) bf16

    # x = tanh(l1(x))
    h1 = jnp.tanh(
        jnp.dot(xp, w_ref[0], preferred_element_type=jnp.float32) + b_ref[0])

    # identity = x ; x = tanh(l2(x)) + identity
    h2 = jnp.tanh(
        jnp.dot(h1.astype(jnp.bfloat16), w_ref[1],
                preferred_element_type=jnp.float32) + b_ref[1]) + h1

    # skip = x ; return l3(x) + skip
    y = (jnp.dot(h2.astype(jnp.bfloat16), w_ref[2],
                 preferred_element_type=jnp.float32) + b_ref[2] + h2)

    o_ref[...] = y[:, :F_IN].astype(o_ref.dtype)


def prepare_params(w1, b1, w2, b2, w3, b3):
    """Pad (151,151)/(1,151) f32 params to (256,256)/(1,256), stack; weights -> bf16.

    Zero padding is exact for this network: padded input lanes are zero, padded
    weight rows/cols and bias lanes are zero, and tanh(0) == 0, so padded lanes
    stay zero through every layer.
    """
    def pad_w(w):
        return jnp.zeros((F_PAD, F_PAD), jnp.float32).at[:F_IN, :F_IN].set(w)

    def pad_b(b):
        return jnp.zeros((1, F_PAD), jnp.float32).at[:, :F_IN].set(b.reshape(1, F_IN))

    w_stack = jnp.stack([pad_w(w1), pad_w(w2), pad_w(w3)]).astype(jnp.bfloat16)
    b_stack = jnp.stack([pad_b(b1), pad_b(b2), pad_b(b3)])  # (3, 1, 256) f32
    return w_stack, b_stack


@functools.partial(jax.jit, static_argnames=("tile_b", "out_dtype"))
def network_selector_forward(x, w_stack, b_stack, *, tile_b=2048,
                             out_dtype=jnp.float32):
    """x: (B, 151) float.  w_stack: (3,256,256) bf16.  b_stack: (3,1,256) f32."""
    B = x.shape[0]
    assert x.shape[1] == F_IN

    # ---- batch tiling -------------------------------------------------------
    tile_b = max(8, (int(tile_b) // 8) * 8)          # sublane-aligned tile
    n_tiles = max(1, _cdiv(B, tile_b))
    if n_tiles == 1 and B >= 1024:
        # Keep >= 2 grid steps so the "parallel" batch axis can shard across
        # both TensorCores on v7x.
        n_tiles = 2
    tb = _round_up(_cdiv(B, n_tiles), 8)             # shrink tile, don't over-pad
    b_pad = tb * n_tiles

    if b_pad != B:                                   # pads at most a few rows
        x = jnp.pad(x, ((0, b_pad - B), (0, 0)))

    out = pl.pallas_call(
        _network_selector_kernel,
        out_shape=jax.ShapeDtypeStruct((b_pad, F_IN), out_dtype),
        grid_spec=pltpu.PrefetchScalarGridSpec(
            num_scalar_prefetch=0,
            grid=(n_tiles,),
            in_specs=[
                # raw (B,151) x tile: no wrapper-side pad/cast pass over HBM
                pl.BlockSpec((tb, F_IN), lambda i: (i, 0)),
                # weights / biases: constant block index -> fetched once, resident
                pl.BlockSpec((3, F_PAD, F_PAD), lambda i: (0, 0, 0)),
                pl.BlockSpec((3, 1, F_PAD), lambda i: (0, 0, 0)),
            ],
            out_specs=pl.BlockSpec((tb, F_IN), lambda i: (i, 0)),
            scratch_shapes=[pltpu.VMEM((tb, F_PAD), jnp.bfloat16)],
        ),
        compiler_params=pltpu.CompilerParams(
            dimension_semantics=("parallel",),       # batch axis -> both TCs on v7x
            vmem_limit_bytes=48 * 1024 * 1024,
        ),
    )(x, w_stack, b_stack)

    return out if b_pad == B else out[:B]


def _reference(x, weights, biases, quantize):
    """Pure-JAX reference.  quantize=True mirrors the kernel's bf16 matmul inputs."""
    def mm(a, w):
        if quantize:
            a = a.astype(jnp.bfloat16).astype(jnp.float32)
            w = w.astype(jnp.bfloat16).astype(jnp.float32)
        return jnp.dot(a, w, precision=jax.lax.Precision.HIGHEST)

    h = x.astype(jnp.float32)
    h1 = jnp.tanh(mm(h, weights[0]) + biases[0])
    h2 = jnp.tanh(mm(h1, weights[1]) + biases[1]) + h1
    return mm(h2, weights[2]) + biases[2] + h2


if __name__ == "__main__":
    B = 8  # small batch consistent with the module's (B, 151) input

    key = jax.random.PRNGKey(0)
    kx, k1, k2, k3, kb1, kb2, kb3 = jax.random.split(key, 7)

    bound = 1.0 / (F_IN ** 0.5)
    x = jax.random.normal(kx, (B, F_IN), dtype=jnp.float32)
    w1 = jax.random.uniform(k1, (F_IN, F_IN), jnp.float32, -bound, bound)
    w2 = jax.random.uniform(k2, (F_IN, F_IN), jnp.float32, -bound, bound)
    w3 = jax.random.uniform(k3, (F_IN, F_IN), jnp.float32, -bound, bound)
    b1 = jax.random.uniform(kb1, (1, F_IN), jnp.float32, -bound, bound)
    b2 = jax.random.uniform(kb2, (1, F_IN), jnp.float32, -bound, bound)
    b3 = jax.random.uniform(kb3, (1, F_IN), jnp.float32, -bound, bound)

    w_stack, b_stack = prepare_params(w1, b1, w2, b2, w3, b3)

    out = network_selector_forward(x, w_stack, b_stack)
    out = jax.block_until_ready(out)
    assert out.shape == (B, F_IN)
    assert out.dtype == jnp.float32

    # Tight check against a bf16-matched reference (same quantized operands, f32 acc).
    ref_bf16 = _reference(x, (w1, w2, w3), (b1, b2, b3), quantize=True)
    assert jnp.allclose(out, ref_bf16, atol=1e-3, rtol=1e-3), \
        "mismatch vs bf16-matched reference"

    # Loose check against the full-f32 module semantics (bf16 weight quantization noise).
    ref_f32 = _reference(x, (w1, w2, w3), (b1, b2, b3), quantize=False)
    assert jnp.allclose(out, ref_f32, atol=5e-2, rtol=5e-2), \
        "mismatch vs f32 module reference"

    print("KERNEL_OK")
</pallas_src>

<mosaic_0001>
module attributes {stable_mosaic.version = 11 : i64} {
  func.func @_network_selector_kernel(%arg0: i32, %arg1: memref<8x151xf32, #tpu.memory_space<vmem>>, %arg2: memref<3x256x256xbf16, #tpu.memory_space<vmem>>, %arg3: memref<3x1x256xf32, #tpu.memory_space<vmem>>, %arg4: memref<8x151xf32, #tpu.memory_space<vmem>>, %arg5: memref<8x256xbf16, #tpu.memory_space<vmem>>) attributes {dimension_semantics = [#tpu.dimension_semantics<parallel>], iteration_bounds = array<i64: 1>, scalar_prefetch = 0 : i64, scratch_operands = 1 : i64, tpu.core_type = #tpu.core_type<tc>, window_params = [{transform_indices = @transform_0, window_bounds = array<i64: 8, 151>}, {pipeline_mode = #tpu.pipeline_mode<synchronous>, transform_indices = @transform_1, window_bounds = array<i64: 3, 256, 256>}, {pipeline_mode = #tpu.pipeline_mode<synchronous>, transform_indices = @transform_2, window_bounds = array<i64: 3, 1, 256>}, {transform_indices = @transform_3, window_bounds = array<i64: 8, 151>}]} {
    %cst = arith.constant 0.000000e+00 : bf16
    %0 = vector.broadcast %cst : bf16 to vector<8x105xbf16>
    %c0 = arith.constant 0 : index
    %c151 = arith.constant 151 : index
    %1 = vector.load %arg5[%c0, %c151] : memref<8x256xbf16, #tpu.memory_space<vmem>>, vector<8x105xbf16>
    tpu.vector_store %arg5[%c0, %c151], %0 {strides = array<i32>} : memref<8x256xbf16, #tpu.memory_space<vmem>>, vector<8x105xbf16>,
    %c0_0 = arith.constant 0 : index
    %c0_1 = arith.constant 0 : index
    %2 = vector.load %arg1[%c0_0, %c0_1] : memref<8x151xf32, #tpu.memory_space<vmem>>, vector<8x151xf32>
    %3 = arith.truncf %2 : vector<8x151xf32> to vector<8x151xbf16>
    %c0_2 = arith.constant 0 : index
    %c0_3 = arith.constant 0 : index
    %4 = vector.load %arg5[%c0_2, %c0_3] : memref<8x256xbf16, #tpu.memory_space<vmem>>, vector<8x151xbf16>
    tpu.vector_store %arg5[%c0_2, %c0_3], %3 {strides = array<i32>} : memref<8x256xbf16, #tpu.memory_space<vmem>>, vector<8x151xbf16>,
    %c0_4 = arith.constant 0 : index
    %c0_5 = arith.constant 0 : index
    %5 = vector.load %arg5[%c0_4, %c0_5] : memref<8x256xbf16, #tpu.memory_space<vmem>>, vector<8x256xbf16>
    %c0_6 = arith.constant 0 : index
    %c0_7 = arith.constant 0 : index
    %c0_8 = arith.constant 0 : index
    %6 = vector.load %arg2[%c0_6, %c0_7, %c0_8] : memref<3x256x256xbf16, #tpu.memory_space<vmem>>, vector<1x256x256xbf16>
    %7 = vector.shape_cast %6 : vector<1x256x256xbf16> to vector<256x256xbf16>
    %cst_9 = arith.constant dense<0.000000e+00> : vector<8x256xf32>
    %8 = tpu.matmul %5, %7, %cst_9 {dimension_numbers = #tpu.dot_dimension_numbers<[1], [0], [0], [1], [0, 0, 1, 1], [], []>} : vector<8x256xbf16>, vector<256x256xbf16>, vector<8x256xf32> -> vector<8x256xf32>
    %c0_10 = arith.constant 0 : index
    %c0_11 = arith.constant 0 : index
    %c0_12 = arith.constant 0 : index
    %9 = vector.load %arg3[%c0_10, %c0_11, %c0_12] : memref<3x1x256xf32, #tpu.memory_space<vmem>>, vector<1x1x256xf32>
    %10 = vector.shape_cast %9 : vector<1x1x256xf32> to vector<1x256xf32>
    %11 = vector.broadcast %10 : vector<1x256xf32> to vector<8x256xf32>
    %12 = arith.addf %8, %11 : vector<8x256xf32>
    %13 = math.tanh %12 : vector<8x256xf32>
    %14 = arith.truncf %13 : vector<8x256xf32> to vector<8x256xbf16>
    %c1 = arith.constant 1 : index
    %c0_13 = arith.constant 0 : index
    %c0_14 = arith.constant 0 : index
    %15 = vector.load %arg2[%c1, %c0_13, %c0_14] : memref<3x256x256xbf16, #tpu.memory_space<vmem>>, vector<1x256x256xbf16>
    %16 = vector.shape_cast %15 : vector<1x256x256xbf16> to vector<256x256xbf16>
    %cst_15 = arith.constant dense<0.000000e+00> : vector<8x256xf32>
    %17 = tpu.matmul %14, %16, %cst_15 {dimension_numbers = #tpu.dot_dimension_numbers<[1], [0], [0], [1], [0, 0, 1, 1], [], []>} : vector<8x256xbf16>, vector<256x256xbf16>, vector<8x256xf32> -> vector<8x256xf32>
    %c1_16 = arith.constant 1 : index
    %c0_17 = arith.constant 0 : index
    %c0_18 = arith.constant 0 : index
    %18 = vector.load %arg3[%c1_16, %c0_17, %c0_18] : memref<3x1x256xf32, #tpu.memory_space<vmem>>, vector<1x1x256xf32>
    %19 = vector.shape_cast %18 : vector<1x1x256xf32> to vector<1x256xf32>
    %20 = vector.broadcast %19 : vector<1x256xf32> to vector<8x256xf32>
    %21 = arith.addf %17, %20 : vector<8x256xf32>
    %22 = math.tanh %21 : vector<8x256xf32>
    %23 = arith.addf %22, %13 : vector<8x256xf32>
    %24 = arith.truncf %23 : vector<8x256xf32> to vector<8x256xbf16>
    %c2 = arith.constant 2 : index
    %c0_19 = arith.constant 0 : index
    %c0_20 = arith.constant 0 : index
    %25 = vector.load %arg2[%c2, %c0_19, %c0_20] : memref<3x256x256xbf16, #tpu.memory_space<vmem>>, vector<1x256x256xbf16>
    %26 = vector.shape_cast %25 : vector<1x256x256xbf16> to vector<256x256xbf16>
    %cst_21 = arith.constant dense<0.000000e+00> : vector<8x256xf32>
    %27 = tpu.matmul %24, %26, %cst_21 {dimension_numbers = #tpu.dot_dimension_numbers<[1], [0], [0], [1], [0, 0, 1, 1], [], []>} : vector<8x256xbf16>, vector<256x256xbf16>, vector<8x256xf32> -> vector<8x256xf32>
    %c2_22 = arith.constant 2 : index
    %c0_23 = arith.constant 0 : index
    %c0_24 = arith.constant 0 : index
    %28 = vector.load %arg3[%c2_22, %c0_23, %c0_24] : memref<3x1x256xf32, #tpu.memory_space<vmem>>, vector<1x1x256xf32>
    %29 = vector.shape_cast %28 : vector<1x1x256xf32> to vector<1x256xf32>
    %30 = vector.broadcast %29 : vector<1x256xf32> to vector<8x256xf32>
    %31 = arith.addf %27, %30 : vector<8x256xf32>
    %32 = arith.addf %31, %23 : vector<8x256xf32>
    %33 = vector.extract_strided_slice %32 {offsets = [0, 0], sizes = [8, 151], strides = [1, 1]} : vector<8x256xf32> to vector<8x151xf32>
    %c0_25 = arith.constant 0 : index
    %c0_26 = arith.constant 0 : index
    %34 = vector.load %arg4[%c0_25, %c0_26] : memref<8x151xf32, #tpu.memory_space<vmem>>, vector<8x151xf32>
    tpu.vector_store %arg4[%c0_25, %c0_26], %33 {strides = array<i32>} : memref<8x151xf32, #tpu.memory_space<vmem>>, vector<8x151xf32>,
    return
  }
  func.func @transform_0(%arg0: i32) -> (i32, i32) {
    %c0_i32 = arith.constant 0 : i32
    %c0_i32_0 = arith.constant 0 : i32
    return %arg0, %c0_i32 : i32, i32
  }
  func.func @transform_1(%arg0: i32) -> (i32, i32, i32) {
    %c0_i32 = arith.constant 0 : i32
    %c0_i32_0 = arith.constant 0 : i32
    %c0_i32_1 = arith.constant 0 : i32
    %c0_i32_2 = arith.constant 0 : i32
    return %c0_i32, %c0_i32_0, %c0_i32_1 : i32, i32, i32
  }
  func.func @transform_2(%arg0: i32) -> (i32, i32, i32) {
    %c0_i32 = arith.constant 0 : i32
    %c0_i32_0 = arith.constant 0 : i32
    %c0_i32_1 = arith.constant 0 : i32
    %c0_i32_2 = arith.constant 0 : i32
    return %c0_i32, %c0_i32_0, %c0_i32_1 : i32, i32, i32
  }
  func.func @transform_3(%arg0: i32) -> (i32, i32) {
    %c0_i32 = arith.constant 0 : i32
    %c0_i32_0 = arith.constant 0 : i32
    return %arg0, %c0_i32 : i32, i32
  }
}

</mosaic_0001>

<llo_original>
// kernel: network_selector_forward.1
$region0: #{network_selector_forward.1}
  #allocation0 [shape = 'u32[]', space=smem, size = 0x4, offset = 0x4, fixed_abs, tag = 'smem constant byte address 0x4 - core index']
  #allocation1 [shape = 'u32[72,128]{1,0:T(1,128)}', space=vmem, size = 0x9000, scoped, tag = 'internal scratch']
  #allocation2 [shape = 'bf16[8,256]{1,0:T(8,128)(2,1)}', space=vmem, size = 0x1000, scoped, tag = 'scratch operand']
  %s0 = inlined_call_operand.hbm [shape: f32[8,151], index: 0, kind: input, shape index: {}]
  %s1 = inlined_call_operand.hbm [shape: bf16[3,256,256], index: 1, kind: input, shape index: {}]
  %s2 = inlined_call_operand.hbm [shape: f32[3,1,256], index: 2, kind: input, shape index: {}]
  %s3 = inlined_call_operand.hbm [shape: f32[8,151], index: 3, kind: output, shape index: {}]
  %s4 = sld [smem:[#allocation0]]
  $region34: #{network_selector_forward.1} parent=0
    _
  %s6 = ssub.s32 1, %s4
  %s7 = scalar_select 0, %s6, %s4
  $region1: #{network_selector_forward.1} parent=0
    #allocation3 [shape = 'u8[8192]{0}', space=vmem, size = 0x2000, scoped, tag = 'input window, operand 0, single buffered']
    #allocation4 [shape = 's32[1]{0}', space=sflag, size = 0x4, scoped, tag = 'scoped memory for network_selector_forward.1']
    #allocation5 [shape = 's32[1]{0}', space=sflag, size = 0x4, scoped, tag = 'scoped memory for network_selector_forward.1']
    #allocation6 [shape = 'u8[393216]{0}', space=vmem, size = 0x60000, scoped, tag = 'input window, operand 1, single buffered']
    #allocation7 [shape = 's32[1]{0}', space=sflag, size = 0x4, scoped, tag = 'scoped memory for network_selector_forward.1']
    #allocation8 [shape = 'u8[3072]{0}', space=vmem, size = 0xc00, scoped, tag = 'input window, operand 2, single buffered']
    #allocation9 [shape = 'u8[8192]{0}', space=vmem, size = 0x2000, scoped, tag = 'output window, operand 0, single buffered']
    %8 = vsyncpa [#allocation4], 0
    %9 = vsyncpa [#allocation7], 0
    %10 = vsyncpa [#allocation5], 0
    // Predicated region
    $region2: #{network_selector_forward.1} parent=1 // pred_check
      _
    $region3: #{network_selector_forward.1} parent=1 // pred_check_branch
      %12 = sbr.rel (0) target = $region5
    $region4: #{network_selector_forward.1} parent=1 // pred_region
      %14 = vsyncadd [#allocation4], 0
      %s16 = sshll.u32 %s0, 4
      %s17 = int_to_ptr.hbm [resolvable:$true] %s16
      %s18 = sshll.u32 [#allocation3], 4
      %s19 = int_to_ptr.vmem [resolvable:$true] %s18
      %21 = dma.hbm_to_vmem [thread:$0]  %s17, 256, %s19, [#allocation4]
    $region5: #{network_selector_forward.1} parent=1 // pred_fallthru
      _
    // Predicated region
    $region6: #{network_selector_forward.1} parent=1 // pred_check
      _
    $region7: #{network_selector_forward.1} parent=1 // pred_check_branch
      %23 = sbr.rel (0) target = $region9
    $region8: #{network_selector_forward.1} parent=1 // pred_region
      %25 = vsyncadd [#allocation7], 0
      %s26 = sshll.u32 %s1, 4
      %s27 = int_to_ptr.hbm [resolvable:$true] %s26
      %s28 = sshll.u32 [#allocation6], 4
      %s29 = int_to_ptr.vmem [resolvable:$true] %s28
      %34 = dma.hbm_to_vmem [thread:$0]  %s27, 12288, %s29, [#allocation7], 128, 128, 8
    $region9: #{network_selector_forward.1} parent=1 // pred_fallthru
      _
    // Predicated region
    $region10: #{network_selector_forward.1} parent=1 // pred_check
      _
    $region11: #{network_selector_forward.1} parent=1 // pred_check_branch
      %36 = sbr.rel (0) target = $region13
    $region12: #{network_selector_forward.1} parent=1 // pred_region
      %38 = vsyncadd [#allocation7], 0
      %s39 = sshll.u32 %s2, 4
      %s40 = int_to_ptr.hbm [resolvable:$true] %s39
      %s41 = sshll.u32 [#allocation8], 4
      %s42 = int_to_ptr.vmem [resolvable:$true] %s41
      %47 = dma.hbm_to_vmem [thread:$0]  %s40, 96, %s42, [#allocation7], 32, 32, 2
    $region13: #{network_selector_forward.1} parent=1 // pred_fallthru
      _
    // Predicated region
    $region14: #{network_selector_forward.1} parent=1 // pred_check
      _
    $region15: #{network_selector_forward.1} parent=1 // pred_check_branch
      %49 = sbr.rel (0) target = $region17
    $region16: #{network_selector_forward.1} parent=1 // pred_region
      %51 = dma.done [#allocation4], 256
    $region17: #{network_selector_forward.1} parent=1 // pred_fallthru
      _
    // Predicated region
    $region18: #{network_selector_forward.1} parent=1 // pred_check
      _
    $region19: #{network_selector_forward.1} parent=1 // pred_check_branch
      %53 = sbr.rel (0) target = $region21
    $region20: #{network_selector_forward.1} parent=1 // pred_region
      %55 = dma.done [#allocation7], 12288
    $region21: #{network_selector_forward.1} parent=1 // pred_fallthru
      _
    // Predicated region
    $region22: #{network_selector_forward.1} parent=1 // pred_check
      _
    $region23: #{network_selector_forward.1} parent=1 // pred_check_branch
      %57 = sbr.rel (0) target = $region25
    $region24: #{network_selector_forward.1} parent=1 // pred_region
      %59 = dma.done [#allocation7], 96
    $region25: #{network_selector_forward.1} parent=1 // pred_fallthru
      _
    %vm61 = vcmask 1043640
    %62 = vst.msk [vmem:[#allocation2 + $0x4] sm:$0xf] %vm61, 0
    %v63 = vld [vmem:[#allocation3] sm:$0xff]
    %v64 = vld [vmem:[#allocation3 + $0x8] sm:$0xff]
    %v65 = vpack.c.bf16 %v64, %v63
    %vm66 = vcmask 1043456
    %vm67 = vcmask 187396
    %vm68 = vmor %vm67, %vm66
    %69 = vst.msk [vmem:[#allocation2] sm:$0xff] %vm68, %v65
    %v70 = vld [vmem:[#allocation2] sm:$0xff]
    %v71 = vld [vmem:[#allocation6] sm:$0xff]
    %v72 = vld [vmem:[#allocation6 + $0x8] sm:$0xff]
    %v73 = vld [vmem:[#allocation6 + $0x10] sm:$0xff]
    %v74 = vld [vmem:[#allocation6 + $0x18] sm:$0xff]
    %v75 = vld [vmem:[#allocation6 + $0x20] sm:$0xff]
    %v76 = vld [vmem:[#allocation6 + $0x28] sm:$0xff]
    %v77 = vld [vmem:[#allocation6 + $0x30] sm:$0xff]
    %v78 = vld [vmem:[#allocation6 + $0x38] sm:$0xff]
    %v79 = vld [vmem:[#allocation6 + $0x40] sm:$0xff]
    %v80 = vld [vmem:[#allocation6 + $0x48] sm:$0xff]
    %v81 = vld [vmem:[#allocation6 + $0x50] sm:$0xff]
    %v82 = vld [vmem:[#allocation6 + $0x58] sm:$0xff]
    %v83 = vld [vmem:[#allocation6 + $0x60] sm:$0xff]
    %v84 = vld [vmem:[#allocation6 + $0x68] sm:$0xff]
    %v85 = vld [vmem:[#allocation6 + $0x70] sm:$0xff]
    %v86 = vld [vmem:[#allocation6 + $0x78] sm:$0xff]
    %v87 = vld [vmem:[#allocation6 + $0x80] sm:$0xff]
    %v88 = vld [vmem:[#allocation6 + $0x88] sm:$0xff]
    %v89 = vld [vmem:[#allocation6 + $0x90] sm:$0xff]
    %v90 = vld [vmem:[#allocation6 + $0x98] sm:$0xff]
    %v91 = vld [vmem:[#allocation6 + $0xa0] sm:$0xff]
    %v92 = vld [vmem:[#allocation6 + $0xa8] sm:$0xff]
    %v93 = vld [vmem:[#allocation6 + $0xb0] sm:$0xff]
    %v94 = vld [vmem:[#allocation6 + $0xb8] sm:$0xff]
    %v95 = vld [vmem:[#allocation6 + $0xc0] sm:$0xff]
    %v96 = vld [vmem:[#allocation6 + $0xc8] sm:$0xff]
    %v97 = vld [vmem:[#allocation6 + $0xd0] sm:$0xff]
    %v98 = vld [vmem:[#allocation6 + $0xd8] sm:$0xff]
    %v99 = vld [vmem:[#allocation6 + $0xe0] sm:$0xff]
    %v100 = vld [vmem:[#allocation6 + $0xe8] sm:$0xff]
    %v101 = vld [vmem:[#allocation6 + $0xf0] sm:$0xff]
    %v102 = vld [vmem:[#allocation6 + $0xf8] sm:$0xff]
    %v103 = vld [vmem:[#allocation8] sm:$0x3]
    %v105 = vperm.slane %v103, 0
    %v106 = vperm.slane %v103, 1
    %v110 = vunpack.c.l.b16 %v70
    %v111 = vunpack.c.h.b16 %v70
    %v112 = vpack.c.b16 %v110, %v110
    %v113 = vpack.c.b16 %v111, %v111
    %v148 = vunpack.c.l.b16 %v71
    %v149 = vunpack.c.h.b16 %v71
    %v150 = vunpack.c.l.b16 %v72
    %v151 = vunpack.c.h.b16 %v72
    %v152 = vunpack.c.l.b16 %v73
    %v153 = vunpack.c.h.b16 %v73
    %v154 = vunpack.c.l.b16 %v74
    %v155 = vunpack.c.h.b16 %v74
    %v156 = vunpack.c.l.b16 %v75
    %v157 = vunpack.c.h.b16 %v75
    %v158 = vunpack.c.l.b16 %v76
    %v159 = vunpack.c.h.b16 %v76
    %v160 = vunpack.c.l.b16 %v77
    %v161 = vunpack.c.h.b16 %v77
    %v162 = vunpack.c.l.b16 %v78
    %v163 = vunpack.c.h.b16 %v78
    %v164 = vunpack.c.l.b16 %v79
    %v165 = vunpack.c.h.b16 %v79
    %v166 = vunpack.c.l.b16 %v80
    %v167 = vunpack.c.h.b16 %v80
    %v168 = vunpack.c.l.b16 %v81
    %v169 = vunpack.c.h.b16 %v81
    %v170 = vunpack.c.l.b16 %v82
    %v171 = vunpack.c.h.b16 %v82
    %v172 = vunpack.c.l.b16 %v83
    %v173 = vunpack.c.h.b16 %v83
    %v174 = vunpack.c.l.b16 %v84
    %v175 = vunpack.c.h.b16 %v84
    %v176 = vunpack.c.l.b16 %v85
    %v177 = vunpack.c.h.b16 %v85
    %v178 = vunpack.c.l.b16 %v86
    %v179 = vunpack.c.h.b16 %v86
    %v180 = vunpack.c.l.b16 %v87
    %v181 = vunpack.c.h.b16 %v87
    %v182 = vunpack.c.l.b16 %v88
    %v183 = vunpack.c.h.b16 %v88
    %v184 = vunpack.c.l.b16 %v89
    %v185 = vunpack.c.h.b16 %v89
    %v186 = vunpack.c.l.b16 %v90
    %v187 = vunpack.c.h.b16 %v90
    %v188 = vunpack.c.l.b16 %v91
    %v189 = vunpack.c.h.b16 %v91
    %v190 = vunpack.c.l.b16 %v92
    %v191 = vunpack.c.h.b16 %v92
    %v192 = vunpack.c.l.b16 %v93
    %v193 = vunpack.c.h.b16 %v93
    %v194 = vunpack.c.l.b16 %v94
    %v195 = vunpack.c.h.b16 %v94
    %v196 = vunpack.c.l.b16 %v95
    %v197 = vunpack.c.h.b16 %v95
    %v198 = vunpack.c.l.b16 %v96
    %v199 = vunpack.c.h.b16 %v96
    %v200 = vunpack.c.l.b16 %v97
    %v201 = vunpack.c.h.b16 %v97
    %v202 = vunpack.c.l.b16 %v98
    %v203 = vunpack.c.h.b16 %v98
    %v204 = vunpack.c.l.b16 %v99
    %v205 = vunpack.c.h.b16 %v99
    %v206 = vunpack.c.l.b16 %v100
    %v207 = vunpack.c.h.b16 %v100
    %v208 = vunpack.c.l.b16 %v101
    %v209 = vunpack.c.h.b16 %v101
    %v210 = vunpack.c.l.b16 %v102
    %v211 = vunpack.c.h.b16 %v102
    %v212 = vpack.c.b16 %v150, %v148
    %v213 = vpack.c.b16 %v151, %v149
    %v214 = vpack.c.b16 %v154, %v152
    %v215 = vpack.c.b16 %v155, %v153
    %v216 = vpack.c.b16 %v158, %v156
    %v217 = vpack.c.b16 %v159, %v157
    %v218 = vpack.c.b16 %v162, %v160
    %v219 = vpack.c.b16 %v163, %v161
    %v220 = vpack.c.b16 %v166, %v164
    %v221 = vpack.c.b16 %v167, %v165
    %v222 = vpack.c.b16 %v170, %v168
    %v223 = vpack.c.b16 %v171, %v169
    %v224 = vpack.c.b16 %v174, %v172
    %v225 = vpack.c.b16 %v175, %v173
    %v226 = vpack.c.b16 %v178, %v176
    %v227 = vpack.c.b16 %v179, %v177
    %v228 = vpack.c.b16 %v182, %v180
    %v229 = vpack.c.b16 %v183, %v181
    %v230 = vpack.c.b16 %v186, %v184
    %v231 = vpack.c.b16 %v187, %v185
    %v232 = vpack.c.b16 %v190, %v188
    %v233 = vpack.c.b16 %v191, %v189
    %v234 = vpack.c.b16 %v194, %v192
    %v235 = vpack.c.b16 %v195, %v193
    %v236 = vpack.c.b16 %v198, %v196
    %v237 = vpack.c.b16 %v199, %v197
    %v238 = vpack.c.b16 %v202, %v200
    %v239 = vpack.c.b16 %v203, %v201
    %v240 = vpack.c.b16 %v206, %v204
    %v241 = vpack.c.b16 %v207, %v205
    %v242 = vpack.c.b16 %v210, %v208
    %v243 = vpack.c.b16 %v211, %v209
    %276 = vmatpush.bf16.msra.mxu0 %v226
    %277 = vmatpush.bf16.msra.mxu0 %v224
    %278 = vmatpush.bf16.msra.mxu0 %v222
    %279 = vmatpush.bf16.msra.mxu0 %v220
    %280 = vmatpush.bf16.msra.mxu0 %v218
    %281 = vmatpush.bf16.msra.mxu0 %v216
    %282 = vmatpush.bf16.msra.mxu0 %v214
    %283 = vmatpush.bf16.msra.mxu0 %v212
    %284 = vmatmul.bf16.gmra.mxu0 %v112
    %v285 = vpop.f32.mrf.mxu0
    %v286 = vadd.f32 %v105, %v285
    %v287 = vpop.f32.mrf.mxu0
    %288 = vdwg.mxu0
    %289 = vmatpush.bf16.msra.mxu0 %v242
    %290 = vmatpush.bf16.msra.mxu0 %v240
    %291 = vmatpush.bf16.msra.mxu0 %v238
    %292 = vmatpush.bf16.msra.mxu0 %v236
    %293 = vmatpush.bf16.msra.mxu0 %v234
    %294 = vmatpush.bf16.msra.mxu0 %v232
    %295 = vmatpush.bf16.msra.mxu0 %v230
    %296 = vmatpush.bf16.msra.mxu0 %v228
    %297 = vmatmul.bf16.gmra.mxu0 %v113
    %v298 = vpop.f32.mrf.mxu0
    %v299 = vadd.f32 %v286, %v298
    %v300 = vpop.f32.mrf.mxu0
    %301 = vdwg.mxu0
    %302 = vmatpush.bf16.msra.mxu0 %v227
    %303 = vmatpush.bf16.msra.mxu0 %v225
    %304 = vmatpush.bf16.msra.mxu0 %v223
    %305 = vmatpush.bf16.msra.mxu0 %v221
    %306 = vmatpush.bf16.msra.mxu0 %v219
    %307 = vmatpush.bf16.msra.mxu0 %v217
    %308 = vmatpush.bf16.msra.mxu0 %v215
    %309 = vmatpush.bf16.msra.mxu0 %v213
    %310 = vmatmul.bf16.gmra.mxu0 %v112
    %v311 = vpop.f32.mrf.mxu0
    %v312 = vadd.f32 %v106, %v311
    %v313 = vpop.f32.mrf.mxu0
    %314 = vdwg.mxu0
    %315 = vmatpush.bf16.msra.mxu0 %v243
    %316 = vmatpush.bf16.msra.mxu0 %v241
    %317 = vmatpush.bf16.msra.mxu0 %v239
    %318 = vmatpush.bf16.msra.mxu0 %v237
    %319 = vmatpush.bf16.msra.mxu0 %v235
    %320 = vmatpush.bf16.msra.mxu0 %v233
    %321 = vmatpush.bf16.msra.mxu0 %v231
    %322 = vmatpush.bf16.msra.mxu0 %v229
    %323 = vmatmul.bf16.gmra.mxu0 %v113
    %v324 = vpop.f32.mrf.mxu0
    %v325 = vadd.f32 %v312, %v324
    %v326 = vpop.f32.mrf.mxu0
    %327 = vdwg.mxu0
    %v328 = vtanh.pop %v299
    %v329 = vtanh.pop %v325
    %v330 = vpack.c.bf16 %v328, %v328
    %v331 = vpack.c.bf16 %v329, %v329
    %s332 = scalar_lea.vmem [#allocation6], 256
    %v333 = vld [vmem:[%s332] sm:$0xff]
    %v334 = vld [vmem:[%s332 + $0x8] sm:$0xff]
    %v335 = vld [vmem:[%s332 + $0x10] sm:$0xff]
    %v336 = vld [vmem:[%s332 + $0x18] sm:$0xff]
    %v337 = vld [vmem:[%s332 + $0x20] sm:$0xff]
    %v338 = vld [vmem:[%s332 + $0x28] sm:$0xff]
    %v339 = vld [vmem:[%s332 + $0x30] sm:$0xff]
    %v340 = vld [vmem:[%s332 + $0x38] sm:$0xff]
    %v341 = vld [vmem:[%s332 + $0x40] sm:$0xff]
    %v342 = vld [vmem:[%s332 + $0x48] sm:$0xff]
    %v343 = vld [vmem:[%s332 + $0x50] sm:$0xff]
    %v344 = vld [vmem:[%s332 + $0x58] sm:$0xff]
    %v345 = vld [vmem:[%s332 + $0x60] sm:$0xff]
    %v346 = vld [vmem:[%s332 + $0x68] sm:$0xff]
    %v347 = vld [vmem:[%s332 + $0x70] sm:$0xff]
    %v348 = vld [vmem:[%s332 + $0x78] sm:$0xff]
    %v349 = vld [vmem:[%s332 + $0x80] sm:$0xff]
    %v350 = vld [vmem:[%s332 + $0x88] sm:$0xff]
    %v351 = vld [vmem:[%s332 + $0x90] sm:$0xff]
    %v352 = vld [vmem:[%s332 + $0x98] sm:$0xff]
    %v353 = vld [vmem:[%s332 + $0xa0] sm:$0xff]
    %v354 = vld [vmem:[%s332 + $0xa8] sm:$0xff]
    %v355 = vld [vmem:[%s332 + $0xb0] sm:$0xff]
    %v356 = vld [vmem:[%s332 + $0xb8] sm:$0xff]
    %v357 = vld [vmem:[%s332 + $0xc0] sm:$0xff]
    %v358 = vld [vmem:[%s332 + $0xc8] sm:$0xff]
    %v359 = vld [vmem:[%s332 + $0xd0] sm:$0xff]
    %v360 = vld [vmem:[%s332 + $0xd8] sm:$0xff]
    %v361 = vld [vmem:[%s332 + $0xe0] sm:$0xff]
    %v362 = vld [vmem:[%s332 + $0xe8] sm:$0xff]
    %v363 = vld [vmem:[%s332 + $0xf0] sm:$0xff]
    %v364 = vld [vmem:[%s332 + $0xf8] sm:$0xff]
    %s365 = scalar_lea.vmem [#allocation8], 2
    %v366 = vld [vmem:[%s365] sm:$0x3]
    %v368 = vperm.slane %v366, 0
    %v369 = vperm.slane %v366, 1
    %v404 = vunpack.c.l.b16 %v333
    %v405 = vunpack.c.h.b16 %v333
    %v406 = vunpack.c.l.b16 %v334
    %v407 = vunpack.c.h.b16 %v334
    %v408 = vunpack.c.l.b16 %v335
    %v409 = vunpack.c.h.b16 %v335
    %v410 = vunpack.c.l.b16 %v336
    %v411 = vunpack.c.h.b16 %v336
    %v412 = vunpack.c.l.b16 %v337
    %v413 = vunpack.c.h.b16 %v337
    %v414 = vunpack.c.l.b16 %v338
    %v415 = vunpack.c.h.b16 %v338
    %v416 = vunpack.c.l.b16 %v339
    %v417 = vunpack.c.h.b16 %v339
    %v418 = vunpack.c.l.b16 %v340
    %v419 = vunpack.c.h.b16 %v340
    %v420 = vunpack.c.l.b16 %v341
    %v421 = vunpack.c.h.b16 %v341
    %v422 = vunpack.c.l.b16 %v342
    %v423 = vunpack.c.h.b16 %v342
    %v424 = vunpack.c.l.b16 %v343
    %v425 = vunpack.c.h.b16 %v343
    %v426 = vunpack.c.l.b16 %v344
    %v427 = vunpack.c.h.b16 %v344
    %v428 = vunpack.c.l.b16 %v345
    %v429 = vunpack.c.h.b16 %v345
    %v430 = vunpack.c.l.b16 %v346
    %v431 = vunpack.c.h.b16 %v346
    %v432 = vunpack.c.l.b16 %v347
    %v433 = vunpack.c.h.b16 %v347
    %v434 = vunpack.c.l.b16 %v348
    %v435 = vunpack.c.h.b16 %v348
    %v436 = vunpack.c.l.b16 %v349
    %v437 = vunpack.c.h.b16 %v349
    %v438 = vunpack.c.l.b16 %v350
    %v439 = vunpack.c.h.b16 %v350
    %v440 = vunpack.c.l.b16 %v351
    %v441 = vunpack.c.h.b16 %v351
    %v442 = vunpack.c.l.b16 %v352
    %v443 = vunpack.c.h.b16 %v352
    %v444 = vunpack.c.l.b16 %v353
    %v445 = vunpack.c.h.b16 %v353
    %v446 = vunpack.c.l.b16 %v354
    %v447 = vunpack.c.h.b16 %v354
    %v448 = vunpack.c.l.b16 %v355
    %v449 = vunpack.c.h.b16 %v355
    %v450 = vunpack.c.l.b16 %v356
    %v451 = vunpack.c.h.b16 %v356
    %v452 = vunpack.c.l.b16 %v357
    %v453 = vunpack.c.h.b16 %v357
    %v454 = vunpack.c.l.b16 %v358
    %v455 = vunpack.c.h.b16 %v358
    %v456 = vunpack.c.l.b16 %v359
    %v457 = vunpack.c.h.b16 %v359
    %v458 = vunpack.c.l.b16 %v360
    %v459 = vunpack.c.h.b16 %v360
    %v460 = vunpack.c.l.b16 %v361
    %v461 = vunpack.c.h.b16 %v361
    %v462 = vunpack.c.l.b16 %v362
    %v463 = vunpack.c.h.b16 %v362
    %v464 = vunpack.c.l.b16 %v363
    %v465 = vunpack.c.h.b16 %v363
    %v466 = vunpack.c.l.b16 %v364
    %v467 = vunpack.c.h.b16 %v364
    %v468 = vpack.c.b16 %v406, %v404
    %v469 = vpack.c.b16 %v407, %v405
    %v470 = vpack.c.b16 %v410, %v408
    %v471 = vpack.c.b16 %v411, %v409
    %v472 = vpack.c.b16 %v414, %v412
    %v473 = vpack.c.b16 %v415, %v413
    %v474 = vpack.c.b16 %v418, %v416
    %v475 = vpack.c.b16 %v419, %v417
    %v476 = vpack.c.b16 %v422, %v420
    %v477 = vpack.c.b16 %v423, %v421
    %v478 = vpack.c.b16 %v426, %v424
    %v479 = vpack.c.b16 %v427, %v425
    %v480 = vpack.c.b16 %v430, %v428
    %v481 = vpack.c.b16 %v431, %v429
    %v482 = vpack.c.b16 %v434, %v432
    %v483 = vpack.c.b16 %v435, %v433
    %v484 = vpack.c.b16 %v438, %v436
    %v485 = vpack.c.b16 %v439, %v437
    %v486 = vpack.c.b16 %v442, %v440
    %v487 = vpack.c.b16 %v443, %v441
    %v488 = vpack.c.b16 %v446, %v444
    %v489 = vpack.c.b16 %v447, %v445
    %v490 = vpack.c.b16 %v450, %v448
    %v491 = vpack.c.b16 %v451, %v449
    %v492 = vpack.c.b16 %v454, %v452
    %v493 = vpack.c.b16 %v455, %v453
    %v494 = vpack.c.b16 %v458, %v456
    %v495 = vpack.c.b16 %v459, %v457
    %v496 = vpack.c.b16 %v462, %v460
    %v497 = vpack.c.b16 %v463, %v461
    %v498 = vpack.c.b16 %v466, %v464
    %v499 = vpack.c.b16 %v467, %v465
    %532 = vmatpush.bf16.msra.mxu0 %v482
    %533 = vmatpush.bf16.msra.mxu0 %v480
    %534 = vmatpush.bf16.msra.mxu0 %v478
    %535 = vmatpush.bf16.msra.mxu0 %v476
    %536 = vmatpush.bf16.msra.mxu0 %v474
    %537 = vmatpush.bf16.msra.mxu0 %v472
    %538 = vmatpush.bf16.msra.mxu0 %v470
    %539 = vmatpush.bf16.msra.mxu0 %v468
    %540 = vmatmul.bf16.gmra.mxu0 %v330
    %v541 = vpop.f32.mrf.mxu0
    %v542 = vadd.f32 %v368, %v541
    %v543 = vpop.f32.mrf.mxu0
    %544 = vdwg.mxu0
    %545 = vmatpush.bf16.msra.mxu0 %v498
    %546 = vmatpush.bf16.msra.mxu0 %v496
    %547 = vmatpush.bf16.msra.mxu0 %v494
    %548 = vmatpush.bf16.msra.mxu0 %v492
    %549 = vmatpush.bf16.msra.mxu0 %v490
    %550 = vmatpush.bf16.msra.mxu0 %v488
    %551 = vmatpush.bf16.msra.mxu0 %v486
    %552 = vmatpush.bf16.msra.mxu0 %v484
    %553 = vmatmul.bf16.gmra.mxu0 %v331
    %v554 = vpop.f32.mrf.mxu0
    %v555 = vadd.f32 %v542, %v554
    %v556 = vpop.f32.mrf.mxu0
    %557 = vdwg.mxu0
    %558 = vmatpush.bf16.msra.mxu0 %v483
    %559 = vmatpush.bf16.msra.mxu0 %v481
    %560 = vmatpush.bf16.msra.mxu0 %v479
    %561 = vmatpush.bf16.msra.mxu0 %v477
    %562 = vmatpush.bf16.msra.mxu0 %v475
    %563 = vmatpush.bf16.msra.mxu0 %v473
    %564 = vmatpush.bf16.msra.mxu0 %v471
    %565 = vmatpush.bf16.msra.mxu0 %v469
    %566 = vmatmul.bf16.gmra.mxu0 %v330
    %v567 = vpop.f32.mrf.mxu0
    %v568 = vadd.f32 %v369, %v567
    %v569 = vpop.f32.mrf.mxu0
    %570 = vdwg.mxu0
    %571 = vmatpush.bf16.msra.mxu0 %v499
    %572 = vmatpush.bf16.msra.mxu0 %v497
    %573 = vmatpush.bf16.msra.mxu0 %v495
    %574 = vmatpush.bf16.msra.mxu0 %v493
    %575 = vmatpush.bf16.msra.mxu0 %v491
    %576 = vmatpush.bf16.msra.mxu0 %v489
    %577 = vmatpush.bf16.msra.mxu0 %v487
    %578 = vmatpush.bf16.msra.mxu0 %v485
    %579 = vmatmul.bf16.gmra.mxu0 %v331
    %v580 = vpop.f32.mrf.mxu0
    %v581 = vadd.f32 %v568, %v580
    %v582 = vpop.f32.mrf.mxu0
    %583 = vdwg.mxu0
    %v584 = vtanh.pop %v555
    %v585 = vtanh.pop %v581
    %v586 = vadd.f32 %v584, %v328
    %v587 = vadd.f32 %v585, %v329
    %v588 = vpack.c.bf16 %v586, %v586
    %v589 = vpack.c.bf16 %v587, %v587
    %s590 = scalar_lea.vmem [#allocation6], 512
    %v591 = vld [vmem:[%s590] sm:$0xff]
    %v592 = vld [vmem:[%s590 + $0x8] sm:$0xff]
    %v593 = vld [vmem:[%s590 + $0x10] sm:$0xff]
    %v594 = vld [vmem:[%s590 + $0x18] sm:$0xff]
    %v595 = vld [vmem:[%s590 + $0x20] sm:$0xff]
    %v596 = vld [vmem:[%s590 + $0x28] sm:$0xff]
    %v597 = vld [vmem:[%s590 + $0x30] sm:$0xff]
    %v598 = vld [vmem:[%s590 + $0x38] sm:$0xff]
    %v599 = vld [vmem:[%s590 + $0x40] sm:$0xff]
    %v600 = vld [vmem:[%s590 + $0x48] sm:$0xff]
    %v601 = vld [vmem:[%s590 + $0x50] sm:$0xff]
    %v602 = vld [vmem:[%s590 + $0x58] sm:$0xff]
    %v603 = vld [vmem:[%s590 + $0x60] sm:$0xff]
    %v604 = vld [vmem:[%s590 + $0x68] sm:$0xff]
    %v605 = vld [vmem:[%s590 + $0x70] sm:$0xff]
    %v606 = vld [vmem:[%s590 + $0x78] sm:$0xff]
    %v607 = vld [vmem:[%s590 + $0x80] sm:$0xff]
    %v608 = vld [vmem:[%s590 + $0x88] sm:$0xff]
    %v609 = vld [vmem:[%s590 + $0x90] sm:$0xff]
    %v610 = vld [vmem:[%s590 + $0x98] sm:$0xff]
    %v611 = vld [vmem:[%s590 + $0xa0] sm:$0xff]
    %v612 = vld [vmem:[%s590 + $0xa8] sm:$0xff]
    %v613 = vld [vmem:[%s590 + $0xb0] sm:$0xff]
    %v614 = vld [vmem:[%s590 + $0xb8] sm:$0xff]
    %v615 = vld [vmem:[%s590 + $0xc0] sm:$0xff]
    %v616 = vld [vmem:[%s590 + $0xc8] sm:$0xff]
    %v617 = vld [vmem:[%s590 + $0xd0] sm:$0xff]
    %v618 = vld [vmem:[%s590 + $0xd8] sm:$0xff]
    %v619 = vld [vmem:[%s590 + $0xe0] sm:$0xff]
    %v620 = vld [vmem:[%s590 + $0xe8] sm:$0xff]
    %v621 = vld [vmem:[%s590 + $0xf0] sm:$0xff]
    %v622 = vld [vmem:[%s590 + $0xf8] sm:$0xff]
    %s623 = scalar_lea.vmem [#allocation8], 4
    %v624 = vld [vmem:[%s623] sm:$0x3]
    %v626 = vperm.slane %v624, 0
    %v627 = vperm.slane %v624, 1
    %v662 = vunpack.c.l.b16 %v591
    %v663 = vunpack.c.h.b16 %v591
    %v664 = vunpack.c.l.b16 %v592
    %v665 = vunpack.c.h.b16 %v592
    %v666 = vunpack.c.l.b16 %v593
    %v667 = vunpack.c.h.b16 %v593
    %v668 = vunpack.c.l.b16 %v594
    %v669 = vunpack.c.h.b16 %v594
    %v670 = vunpack.c.l.b16 %v595
    %v671 = vunpack.c.h.b16 %v595
    %v672 = vunpack.c.l.b16 %v596
    %v673 = vunpack.c.h.b16 %v596
    %v674 = vunpack.c.l.b16 %v597
    %v675 = vunpack.c.h.b16 %v597
    %v676 = vunpack.c.l.b16 %v598
    %v677 = vunpack.c.h.b16 %v598
    %v678 = vunpack.c.l.b16 %v599
    %v679 = vunpack.c.h.b16 %v599
    %v680 = vunpack.c.l.b16 %v600
    %v681 = vunpack.c.h.b16 %v600
    %v682 = vunpack.c.l.b16 %v601
    %v683 = vunpack.c.h.b16 %v601
    %v684 = vunpack.c.l.b16 %v602
    %v685 = vunpack.c.h.b16 %v602
    %v686 = vunpack.c.l.b16 %v603
    %v687 = vunpack.c.h.b16 %v603
    %v688 = vunpack.c.l.b16 %v604
    %v689 = vunpack.c.h.b16 %v604
    %v690 = vunpack.c.l.b16 %v605
    %v691 = vunpack.c.h.b16 %v605
    %v692 = vunpack.c.l.b16 %v606
    %v693 = vunpack.c.h.b16 %v606
    %v694 = vunpack.c.l.b16 %v607
    %v695 = vunpack.c.h.b16 %v607
    %v696 = vunpack.c.l.b16 %v608
    %v697 = vunpack.c.h.b16 %v608
    %v698 = vunpack.c.l.b16 %v609
    %v699 = vunpack.c.h.b16 %v609
    %v700 = vunpack.c.l.b16 %v610
    %v701 = vunpack.c.h.b16 %v610
    %v702 = vunpack.c.l.b16 %v611
    %v703 = vunpack.c.h.b16 %v611
    %v704 = vunpack.c.l.b16 %v612
    %v705 = vunpack.c.h.b16 %v612
    %v706 = vunpack.c.l.b16 %v613
    %v707 = vunpack.c.h.b16 %v613
    %v708 = vunpack.c.l.b16 %v614
    %v709 = vunpack.c.h.b16 %v614
    %v710 = vunpack.c.l.b16 %v615
    %v711 = vunpack.c.h.b16 %v615
    %v712 = vunpack.c.l.b16 %v616
    %v713 = vunpack.c.h.b16 %v616
    %v714 = vunpack.c.l.b16 %v617
    %v715 = vunpack.c.h.b16 %v617
    %v716 = vunpack.c.l.b16 %v618
    %v717 = vunpack.c.h.b16 %v618
    %v718 = vunpack.c.l.b16 %v619
    %v719 = vunpack.c.h.b16 %v619
    %v720 = vunpack.c.l.b16 %v620
    %v721 = vunpack.c.h.b16 %v620
    %v722 = vunpack.c.l.b16 %v621
    %v723 = vunpack.c.h.b16 %v621
    %v724 = vunpack.c.l.b16 %v622
    %v725 = vunpack.c.h.b16 %v622
    %v726 = vpack.c.b16 %v664, %v662
    %v727 = vpack.c.b16 %v665, %v663
    %v728 = vpack.c.b16 %v668, %v666
    %v729 = vpack.c.b16 %v669, %v667
    %v730 = vpack.c.b16 %v672, %v670
    %v731 = vpack.c.b16 %v673, %v671
    %v732 = vpack.c.b16 %v676, %v674
    %v733 = vpack.c.b16 %v677, %v675
    %v734 = vpack.c.b16 %v680, %v678
    %v735 = vpack.c.b16 %v681, %v679
    %v736 = vpack.c.b16 %v684, %v682
    %v737 = vpack.c.b16 %v685, %v683
    %v738 = vpack.c.b16 %v688, %v686
    %v739 = vpack.c.b16 %v689, %v687
    %v740 = vpack.c.b16 %v692, %v690
    %v741 = vpack.c.b16 %v693, %v691
    %v742 = vpack.c.b16 %v696, %v694
    %v743 = vpack.c.b16 %v697, %v695
    %v744 = vpack.c.b16 %v700, %v698
    %v745 = vpack.c.b16 %v701, %v699
    %v746 = vpack.c.b16 %v704, %v702
    %v747 = vpack.c.b16 %v705, %v703
    %v748 = vpack.c.b16 %v708, %v706
    %v749 = vpack.c.b16 %v709, %v707
    %v750 = vpack.c.b16 %v712, %v710
    %v751 = vpack.c.b16 %v713, %v711
    %v752 = vpack.c.b16 %v716, %v714
    %v753 = vpack.c.b16 %v717, %v715
    %v754 = vpack.c.b16 %v720, %v718
    %v755 = vpack.c.b16 %v721, %v719
    %v756 = vpack.c.b16 %v724, %v722
    %v757 = vpack.c.b16 %v725, %v723
    %790 = vmatpush.bf16.msra.mxu0 %v740
    %791 = vmatpush.bf16.msra.mxu0 %v738
    %792 = vmatpush.bf16.msra.mxu0 %v736
    %793 = vmatpush.bf16.msra.mxu0 %v734
    %794 = vmatpush.bf16.msra.mxu0 %v732
    %795 = vmatpush.bf16.msra.mxu0 %v730
    %796 = vmatpush.bf16.msra.mxu0 %v728
    %797 = vmatpush.bf16.msra.mxu0 %v726
    %798 = vmatmul.bf16.gmra.mxu0 %v588
    %v799 = vpop.f32.mrf.mxu0
    %v800 = vadd.f32 %v626, %v799
    %v801 = vpop.f32.mrf.mxu0
    %802 = vdwg.mxu0
    %803 = vmatpush.bf16.msra.mxu0 %v756
    %804 = vmatpush.bf16.msra.mxu0 %v754
    %805 = vmatpush.bf16.msra.mxu0 %v752
    %806 = vmatpush.bf16.msra.mxu0 %v750
    %807 = vmatpush.bf16.msra.mxu0 %v748
    %808 = vmatpush.bf16.msra.mxu0 %v746
    %809 = vmatpush.bf16.msra.mxu0 %v744
    %810 = vmatpush.bf16.msra.mxu0 %v742
    %811 = vmatmul.bf16.gmra.mxu0 %v589
    %v812 = vpop.f32.mrf.mxu0
    %v813 = vadd.f32 %v800, %v812
    %v814 = vpop.f32.mrf.mxu0
    %815 = vdwg.mxu0
    %816 = vmatpush.bf16.msra.mxu0 %v741
    %817 = vmatpush.bf16.msra.mxu0 %v739
    %818 = vmatpush.bf16.msra.mxu0 %v737
    %819 = vmatpush.bf16.msra.mxu0 %v735
    %820 = vmatpush.bf16.msra.mxu0 %v733
    %821 = vmatpush.bf16.msra.mxu0 %v731
    %822 = vmatpush.bf16.msra.mxu0 %v729
    %823 = vmatpush.bf16.msra.mxu0 %v727
    %824 = vmatmul.bf16.gmra.mxu0 %v588
    %v825 = vpop.f32.mrf.mxu0
    %v826 = vadd.f32 %v627, %v825
    %v827 = vpop.f32.mrf.mxu0
    %828 = vdwg.mxu0
    %829 = vmatpush.bf16.msra.mxu0 %v757
    %830 = vmatpush.bf16.msra.mxu0 %v755
    %831 = vmatpush.bf16.msra.mxu0 %v753
    %832 = vmatpush.bf16.msra.mxu0 %v751
    %833 = vmatpush.bf16.msra.mxu0 %v749
    %834 = vmatpush.bf16.msra.mxu0 %v747
    %835 = vmatpush.bf16.msra.mxu0 %v745
    %836 = vmatpush.bf16.msra.mxu0 %v743
    %837 = vmatmul.bf16.gmra.mxu0 %v589
    %v838 = vpop.f32.mrf.mxu0
    %v839 = vadd.f32 %v826, %v838
    %v840 = vpop.f32.mrf.mxu0
    %841 = vdwg.mxu0
    %v842 = vadd.f32 %v813, %v586
    %v843 = vadd.f32 %v839, %v587
    %844 = vst [vmem:[#allocation9] sm:$0xff] %v842
    %vm845 = vcmask 187392
    %846 = vst.msk [vmem:[#allocation9 + $0x8] sm:$0xff] %vm845, %v843
    // Predicated region
    $region26: #{network_selector_forward.1} parent=1 // pred_check
      _
    $region27: #{network_selector_forward.1} parent=1 // pred_check_branch
      %848 = sbr.rel (0) target = $region29
    $region28: #{network_selector_forward.1} parent=1 // pred_region
      %850 = vsyncadd [#allocation5], 0
      %s852 = sshll.u32 [#allocation9], 4
      %s853 = int_to_ptr.vmem [resolvable:$true] %s852
      %s854 = sshll.u32 %s3, 4
      %s855 = int_to_ptr.hbm [resolvable:$true] %s854
      %857 = dma.vmem_to_hbm [thread:$0]  %s853, 256, %s855, [#allocation5]
    $region29: #{network_selector_forward.1} parent=1 // pred_fallthru
      _
    // Predicated region
    $region30: #{network_selector_forward.1} parent=1 // pred_check
      _
    $region31: #{network_selector_forward.1} parent=1 // pred_check_branch
      %859 = sbr.rel (0) target = $region33
    $region32: #{network_selector_forward.1} parent=1 // pred_region
      %861 = dma.done [#allocation5], 256
    $region33: #{network_selector_forward.1} parent=1 // pred_fallthru
      _
    %862 = vsyncpa [#allocation4], 1
    %863 = vsyncpa [#allocation7], 1
    %864 = vsyncpa [#allocation5], 1

</llo_original>
